<compile_context>
chip_gen: v5e
topology: v5e:2x2
jax: 0.10.0
libtpu: 0.0.40
codegen_flags: <defaults>
</compile_context>

<pallas_src>
import functools
import math

import jax
import jax.numpy as jnp
from jax.experimental import pallas as pl
from jax.experimental.pallas import tpu as pltpu

CONFIG = ((0.5, 0.0, 0.0), (1.0, 0.0, 0.0), (2.0, 0.0, 0.0), (4.0, 0.0, 0.0))
_TWO_PI = 2.0 * math.pi


def _const_column(values):
    """(K, 1) f32 vector of static Python floats, built from iota + select.

    Avoids relying on closed-over ndarray constants inside the kernel; the
    handful of selects on a (K, 1) vector is negligible (and foldable).
    """
    k = len(values)
    col = jnp.full((k, 1), float(values[0]), jnp.float32)
    if k > 1:
        kidx = jax.lax.broadcasted_iota(jnp.int32, (k, 1), 0)
        for i in range(1, k):
            col = jnp.where(kidx == i, float(values[i]), col)
    return col


def _add_loc_kernel(hrand_ref, wrand_ref, hmap_ref, wmap_ref, x_ref, o_ref,
                    *, config):
    """Grid = (spatial_tiles, batch); one step = one (spatial tile, batch).

    hrand/wrand : SMEM (B,)        per-batch random phase offsets
    hmap/wmap   : VMEM (1, T)      2*pi * normalized row/col coordinate (flat)
    x_ref       : VMEM (1, C, T)   input channels, lane-dense flat spatial
    o_ref       : VMEM (1, C+K, T) output tile
    """
    b = pl.program_id(1)
    c = x_ref.shape[1]
    k = len(config)

    # Pass-through of the original channels (the "concat" part): one
    # lane-dense store.
    o_ref[0, 0:c, :] = x_ref[0, :, :]

    h_base = hmap_ref[...]                     # (1, T)
    w_base = wmap_ref[...]                     # (1, T)
    hr = hrand_ref[b]
    wr = wrand_ref[b]

    scales = [float(s) for s, _, _ in config]
    hoffs = [float(ho) for _, ho, _ in config]
    woffs = [float(wo) for _, _, wo in config]

    scale_col = _const_column(scales)          # (K, 1)
    # Zero offsets (the default config) fold away at trace time.
    h_bias = (_const_column([v * _TWO_PI for v in hoffs]) + hr
              if any(v != 0.0 for v in hoffs) else hr)
    w_bias = (_const_column([v * _TWO_PI for v in woffs]) + wr
              if any(v != 0.0 for v in woffs) else wr)

    # (1, T) * (K, 1) -> (K, T): all K location channels at once, one store.
    # (Full H+W sin factorization was skipped: it would need a (K,H,W)->(K,HW)
    # relayout in-kernel; per-element sin is cheap VPU filler in this
    # memory-bound regime.)
    h_phase = h_base * scale_col + h_bias
    w_phase = w_base * scale_col + w_bias
    loc = 0.5 * (jnp.sin(h_phase) + jnp.sin(w_phase))
    o_ref[0, c:c + k, :] = loc.astype(o_ref.dtype)


def _pick_spatial_tile(hw, c_in, c_out, budget_bytes=16 << 20, max_lanes=8192):
    """Largest multiple-of-128 spatial tile dividing hw that keeps the
    double-buffered VMEM footprint under budget (full extent if hw is small)."""
    per_lane = 8 * (c_in + c_out + 2)          # f32 bytes/lane, double-buffered
    cap = min(hw, max_lanes, max(128, budget_bytes // per_lane))
    if hw <= cap:
        return hw                              # full extent is always legal
    t = (cap // 128) * 128
    while t >= 128:
        if hw % t == 0:
            return t
        t -= 128
    return hw  # no aligned divisor: fall back to a single full-extent tile


def add_location_info_2d(x, hrand, wrand, config=CONFIG):
    """x: [B, C, H, W]; hrand/wrand: [B] float. Returns [B, C+K, H, W]."""
    b, c, h, w = x.shape
    k = len(config)
    hw = h * w

    # Lane-dense flat spatial layout (free reshape for contiguous NCHW).
    x_flat = x.reshape(b, c, hw)

    # 2*pi-scaled normalized coordinates, flattened; tiny (2 x HW floats).
    # Guard the degenerate H==1 / W==1 case (the torch code would divide by 0).
    inv_h = (1.0 / (h - 1)) if h > 1 else 0.0
    inv_w = (1.0 / (w - 1)) if w > 1 else 0.0
    idx = jnp.arange(hw, dtype=jnp.int32)
    rows = idx // w
    cols = idx % w
    hmap = (rows.astype(jnp.float32) * (inv_h * _TWO_PI)).reshape(1, hw)
    wmap = (cols.astype(jnp.float32) * (inv_w * _TWO_PI)).reshape(1, hw)

    t = _pick_spatial_tile(hw, c, c + k)
    s = hw // t
    smem = pl.BlockSpec(memory_space=pltpu.MemorySpace.SMEM)

    out_flat = pl.pallas_call(
        functools.partial(_add_loc_kernel, config=tuple(config)),
        out_shape=jax.ShapeDtypeStruct((b, c + k, hw), x.dtype),
        grid=(s, b),  # batch innermost: hmap/wmap blocks stay resident
        in_specs=[
            smem,                                              # hrand
            smem,                                              # wrand
            pl.BlockSpec((1, t), lambda j, i: (0, j)),         # hmap
            pl.BlockSpec((1, t), lambda j, i: (0, j)),         # wmap
            pl.BlockSpec((1, c, t), lambda j, i: (i, 0, j)),   # x
        ],
        out_specs=pl.BlockSpec((1, c + k, t), lambda j, i: (i, 0, j)),
        compiler_params=pltpu.CompilerParams(
            dimension_semantics=("parallel", "parallel")),
    )(hrand.astype(jnp.float32), wrand.astype(jnp.float32), hmap, wmap, x_flat)

    return out_flat.reshape(b, c + k, h, w)


def _reference(x, hrand, wrand, config=CONFIG):
    """Pure-JAX transcription of the PyTorch forward (for verification)."""
    b, c, h, w = x.shape
    cfg = jnp.asarray(config, jnp.float32)
    k = cfg.shape[0]
    scale = cfg[:, 0].reshape(1, -1, 1, 1)
    hoff = cfg[:, 1].reshape(1, -1, 1, 1)
    woff = cfg[:, 2].reshape(1, -1, 1, 1)
    harr = (jnp.arange(h, dtype=jnp.float32) / (h - 1)).reshape(1, 1, h, 1)
    warr = (jnp.arange(w, dtype=jnp.float32) / (w - 1)).reshape(1, 1, 1, w)
    harr = (harr * scale + hoff) * (2.0 * math.pi)
    warr = (warr * scale + woff) * (2.0 * math.pi)
    hr = hrand.reshape(b, 1, 1, 1)
    wr = wrand.reshape(b, 1, 1, 1)
    loc = 0.5 * (jnp.sin(harr + hr) + jnp.sin(warr + wr))
    loc = jnp.broadcast_to(loc, (b, k, h, w)).astype(x.dtype)
    return jnp.concatenate([x, loc], axis=1)


if __name__ == "__main__":
    key = jax.random.PRNGKey(0)
    kx, kr = jax.random.split(key)

    B, C, H, W = 2, 4, 16, 16
    x = jax.random.normal(kx, (B, C, H, W), dtype=jnp.float32)

    # torch.empty((b, 2, 1, 1)).uniform_(-1000, 1000).chunk(2, dim=1)
    rand = jax.random.uniform(kr, (B, 2), dtype=jnp.float32,
                              minval=-1000.0, maxval=1000.0)
    hrand, wrand = rand[:, 0], rand[:, 1]

    out = jax.block_until_ready(add_location_info_2d(x, hrand, wrand))
    ref = _reference(x, hrand, wrand)

    assert out.shape == (B, C + len(CONFIG), H, W), out.shape
    # Original channels must pass through bit-exactly.
    assert jnp.array_equal(out[:, :C], x)
    # Location channels: phase arguments reach |x| ~ 1e3 in f32, where one ulp
    # of argument difference (equivalent-but-reordered math vs. the reference)
    # already moves sin by ~1.2e-4, so compare with a tolerance well above
    # that but far below any real bug on O(1) values.
    err = float(jnp.max(jnp.abs(out[:, C:] - ref[:, C:])))
    assert err < 2e-3, err
    print("KERNEL_OK")
</pallas_src>

<mosaic_0001>
module attributes {stable_mosaic.version = 11 : i64} {
  func.func @_add_loc_kernel(%arg0: i32, %arg1: i32, %arg2: memref<2xf32, #tpu.memory_space<smem>>, %arg3: memref<2xf32, #tpu.memory_space<smem>>, %arg4: memref<1x256xf32, #tpu.memory_space<vmem>>, %arg5: memref<1x256xf32, #tpu.memory_space<vmem>>, %arg6: memref<1x4x256xf32, #tpu.memory_space<vmem>>, %arg7: memref<1x8x256xf32, #tpu.memory_space<vmem>>) attributes {dimension_semantics = [#tpu.dimension_semantics<parallel>, #tpu.dimension_semantics<parallel>], iteration_bounds = array<i64: 1, 2>, scalar_prefetch = 0 : i64, scratch_operands = 0 : i64, tpu.core_type = #tpu.core_type<tc>, window_params = [{transform_indices = @transform_0, window_bounds = array<i64: 2>}, {transform_indices = @transform_1, window_bounds = array<i64: 2>}, {transform_indices = @transform_2, window_bounds = array<i64: 1, 256>}, {transform_indices = @transform_3, window_bounds = array<i64: 1, 256>}, {transform_indices = @transform_4, window_bounds = array<i64: 1, 4, 256>}, {transform_indices = @transform_5, window_bounds = array<i64: 1, 8, 256>}]} {
    %c0 = arith.constant 0 : index
    %c0_0 = arith.constant 0 : index
    %c0_1 = arith.constant 0 : index
    %0 = vector.load %arg6[%c0, %c0_0, %c0_1] : memref<1x4x256xf32, #tpu.memory_space<vmem>>, vector<1x4x256xf32>
    %1 = vector.shape_cast %0 : vector<1x4x256xf32> to vector<4x256xf32>
    %c0_2 = arith.constant 0 : index
    %c0_3 = arith.constant 0 : index
    %c0_4 = arith.constant 0 : index
    %2 = vector.load %arg7[%c0_2, %c0_3, %c0_4] : memref<1x8x256xf32, #tpu.memory_space<vmem>>, vector<1x4x256xf32>
    %3 = vector.shape_cast %2 : vector<1x4x256xf32> to vector<4x256xf32>
    %4 = vector.shape_cast %1 : vector<4x256xf32> to vector<1x4x256xf32>
    tpu.vector_store %arg7[%c0_2, %c0_3, %c0_4], %4 {strides = array<i32>} : memref<1x8x256xf32, #tpu.memory_space<vmem>>, vector<1x4x256xf32>,
    %c0_5 = arith.constant 0 : index
    %c0_6 = arith.constant 0 : index
    %5 = vector.load %arg4[%c0_5, %c0_6] : memref<1x256xf32, #tpu.memory_space<vmem>>, vector<1x256xf32>
    %c0_7 = arith.constant 0 : index
    %c0_8 = arith.constant 0 : index
    %6 = vector.load %arg5[%c0_7, %c0_8] : memref<1x256xf32, #tpu.memory_space<vmem>>, vector<1x256xf32>
    %7 = arith.index_cast %arg1 : i32 to index
    %8 = memref.load %arg2[%7] : memref<2xf32, #tpu.memory_space<smem>>
    %9 = arith.index_cast %arg1 : i32 to index
    %10 = memref.load %arg3[%9] : memref<2xf32, #tpu.memory_space<smem>>
    %cst = arith.constant 5.000000e-01 : f32
    %11 = vector.broadcast %cst : f32 to vector<4x1xf32>
    %12 = tpu.iota {dimensions = array<i32: 0>} : vector<4x1xi32>
    %c1_i32 = arith.constant 1 : i32
    %13 = vector.broadcast %c1_i32 : i32 to vector<4x1xi32>
    %14 = arith.cmpi eq, %12, %13 : vector<4x1xi32>
    %cst_9 = arith.constant 1.000000e+00 : f32
    %15 = vector.broadcast %cst_9 : f32 to vector<4x1xf32>
    %16 = arith.select %14, %15, %11 : vector<4x1xi1>, vector<4x1xf32>
    %c2_i32 = arith.constant 2 : i32
    %17 = vector.broadcast %c2_i32 : i32 to vector<4x1xi32>
    %18 = arith.cmpi eq, %12, %17 : vector<4x1xi32>
    %cst_10 = arith.constant 2.000000e+00 : f32
    %19 = vector.broadcast %cst_10 : f32 to vector<4x1xf32>
    %20 = arith.select %18, %19, %16 : vector<4x1xi1>, vector<4x1xf32>
    %c3_i32 = arith.constant 3 : i32
    %21 = vector.broadcast %c3_i32 : i32 to vector<4x1xi32>
    %22 = arith.cmpi eq, %12, %21 : vector<4x1xi32>
    %cst_11 = arith.constant 4.000000e+00 : f32
    %23 = vector.broadcast %cst_11 : f32 to vector<4x1xf32>
    %24 = arith.select %22, %23, %20 : vector<4x1xi1>, vector<4x1xf32>
    %25 = vector.broadcast %5 : vector<1x256xf32> to vector<4x256xf32>
    %26 = vector.broadcast %24 : vector<4x1xf32> to vector<4x256xf32>
    %27 = arith.mulf %25, %26 : vector<4x256xf32>
    %28 = vector.broadcast %8 : f32 to vector<4x256xf32>
    %29 = arith.addf %27, %28 : vector<4x256xf32>
    %30 = vector.broadcast %6 : vector<1x256xf32> to vector<4x256xf32>
    %31 = vector.broadcast %24 : vector<4x1xf32> to vector<4x256xf32>
    %32 = arith.mulf %30, %31 : vector<4x256xf32>
    %33 = vector.broadcast %10 : f32 to vector<4x256xf32>
    %34 = arith.addf %32, %33 : vector<4x256xf32>
    %35 = math.sin %29 : vector<4x256xf32>
    %36 = math.sin %34 : vector<4x256xf32>
    %37 = arith.addf %35, %36 : vector<4x256xf32>
    %cst_12 = arith.constant 5.000000e-01 : f32
    %38 = vector.broadcast %cst_12 : f32 to vector<4x256xf32>
    %39 = arith.mulf %38, %37 : vector<4x256xf32>
    %c0_13 = arith.constant 0 : index
    %c4 = arith.constant 4 : index
    %c0_14 = arith.constant 0 : index
    %40 = vector.load %arg7[%c0_13, %c4, %c0_14] : memref<1x8x256xf32, #tpu.memory_space<vmem>>, vector<1x4x256xf32>
    %41 = vector.shape_cast %40 : vector<1x4x256xf32> to vector<4x256xf32>
    %42 = vector.shape_cast %39 : vector<4x256xf32> to vector<1x4x256xf32>
    tpu.vector_store %arg7[%c0_13, %c4, %c0_14], %42 {strides = array<i32>} : memref<1x8x256xf32, #tpu.memory_space<vmem>>, vector<1x4x256xf32>,
    return
  }
  func.func @transform_0(%arg0: i32, %arg1: i32) -> i32 {
    %c0_i32 = arith.constant 0 : i32
    %c0_i32_0 = arith.constant 0 : i32
    return %c0_i32 : i32
  }
  func.func @transform_1(%arg0: i32, %arg1: i32) -> i32 {
    %c0_i32 = arith.constant 0 : i32
    %c0_i32_0 = arith.constant 0 : i32
    return %c0_i32 : i32
  }
  func.func @transform_2(%arg0: i32, %arg1: i32) -> (i32, i32) {
    %c0_i32 = arith.constant 0 : i32
    %c0_i32_0 = arith.constant 0 : i32
    return %c0_i32, %arg0 : i32, i32
  }
  func.func @transform_3(%arg0: i32, %arg1: i32) -> (i32, i32) {
    %c0_i32 = arith.constant 0 : i32
    %c0_i32_0 = arith.constant 0 : i32
    return %c0_i32, %arg0 : i32, i32
  }
  func.func @transform_4(%arg0: i32, %arg1: i32) -> (i32, i32, i32) {
    %c0_i32 = arith.constant 0 : i32
    %c0_i32_0 = arith.constant 0 : i32
    return %arg1, %c0_i32, %arg0 : i32, i32, i32
  }
  func.func @transform_5(%arg0: i32, %arg1: i32) -> (i32, i32, i32) {
    %c0_i32 = arith.constant 0 : i32
    %c0_i32_0 = arith.constant 0 : i32
    return %arg1, %c0_i32, %arg0 : i32, i32, i32
  }
}

</mosaic_0001>

<llo_original>
// kernel: tpu_custom_call.1
$region0: #{tpu_custom_call.1}
  #allocation0 [shape = 'u32[]', space=smem, size = 0x4, offset = 0x4, fixed_abs, tag = 'smem constant byte address 0x4 - core index']
  #allocation1 [shape = 'u32[72,128]{1,0:T(1,128)}', space=vmem, size = 0x9000, scoped, tag = 'internal scratch']
  %s0 = inlined_call_operand.hbm [shape: f32[2], index: 0, kind: input, shape index: {}]
  %s1 = inlined_call_operand.hbm [shape: f32[2], index: 1, kind: input, shape index: {}]
  %s2 = inlined_call_operand.hbm [shape: f32[1,256], index: 2, kind: input, shape index: {}]
  %s3 = inlined_call_operand.vmem [shape: f32[1,256], index: 3, kind: input, shape index: {}]
  %s4 = inlined_call_operand.hbm [shape: f32[2,4,256], index: 4, kind: input, shape index: {}]
  %s5 = inlined_call_operand.hbm [shape: f32[2,8,256], index: 5, kind: output, shape index: {}]
  %s6 = sld [smem:[#allocation0]]
  $region69: #{tpu_custom_call.1} parent=0
    _
  %s8 = ssub.s32 1, %s6
  %s9 = scalar_select 0, %s8, %s6
  $region1: #{tpu_custom_call.1} parent=0
    #allocation2 [shape = 'u8[512]{0}', space=smem, size = 0x200, scoped, tag = 'input window, operand 0, single buffered']
    #allocation3 [shape = 's32[2]{0}', space=sflag, size = 0x8, scoped, tag = 'scoped memory for tpu_custom_call.1']
    #allocation4 [shape = 's32[2]{0}', space=sflag, size = 0x8, scoped, tag = 'scoped memory for tpu_custom_call.1']
    #allocation5 [shape = 's32[2]{0}', space=sflag, size = 0x8, scoped, tag = 'scoped memory for tpu_custom_call.1']
    #allocation6 [shape = 'u8[512]{0}', space=smem, size = 0x200, scoped, tag = 'input window, operand 1, single buffered']
    #allocation7 [shape = 's32[1]{0}', space=sflag, size = 0x4, scoped, tag = 'scoped memory for tpu_custom_call.1']
    #allocation8 [shape = 'u8[1024]{0}', space=vmem, size = 0x400, scoped, tag = 'input window, operand 2, single buffered']
    #allocation9 [shape = 'u8[8192]{0}', space=vmem, size = 0x2000, scoped, tag = 'input window, operand 4']
    #allocation10 [shape = 's32[2]{0}', space=sflag, size = 0x8, scoped, tag = 'scoped memory for tpu_custom_call.1']
    #allocation11 [shape = 'u8[16384]{0}', space=vmem, size = 0x4000, scoped, tag = 'output window, operand 0']
    %10 = vsyncpa [#allocation5], 0
    %11 = vsyncpa [#allocation7], 0
    %12 = vsyncpa [#allocation3], 0
    %13 = vsyncpa [#allocation10], 0
    %s14 = scalar_lea.sflag [#allocation10], 1
    %15 = vsyncpa %s14, 0
    %16 = vsyncpa [#allocation4], 0
    %s17 = scalar_lea.sflag [#allocation4], 1
    %18 = vsyncpa %s17, 0
    loop: start=0, step=1, limit=4
    $region2: #{tpu_custom_call.1} parent=1 // loop_pre_header
      _
    $region3: #{tpu_custom_call.1} parent=1 // loop_header
      %s20 = sphi 0, %s24
      %p21 = scmp.ge.s32.totalorder %s20, 4
      %s27 = sphi 0, %s39
      %s28 = sphi 0, %s35
      %s29 = sphi 0, %s27
      %s30 = sphi 0, %s28
      %s31 = sphi 0, %s29
      %s32 = sphi 0, %s30
      %s40 = sphi 0, %s40
      %s42 = sphi 0, %s40
      %s43 = sphi 0, %s42
      %s57 = sphi 0, %s43
      %s61 = sphi 0, %s61
      %s63 = sphi 0, %s61
      %s64 = sphi 0, %s63
      %s78 = sphi 0, %s64
      %s84 = sphi 0, %s86
      %s87 = sphi 0, %s84
      %s88 = sphi 0, %s87
      %s104 = sphi 0, %s88
      %s110 = sphi 0, %s112
      %s113 = sphi 0, %s110
      %s114 = sphi 0, %s113
      %s130 = sphi 0, %s114
      %s138 = sphi 0, %s140
      %s141 = sphi 0, %s138
      %s142 = sphi 0, %s141
      %s158 = sphi 0, %s142
      %s166 = sphi 0, %s168
      %s169 = sphi 0, %s166
      %s170 = sphi 0, %s169
      %s186 = sphi 0, %s170
    $region4: #{tpu_custom_call.1} parent=1 // loop_header_branch
      %23 = sbr.rel (%p21) target = $region8
    $region5: #{tpu_custom_call.1} parent=1 // loop_body
      %s25 = ssub.s32 %s20, 1
      %s26 = ssub.s32 %s20, 2
      %s33 = sadd.s32 1, %s28
      %p34 = scmp.ge.s32.totalorder %s33, 2
      %s35 = scalar_select %p34, 0, %s33
      %s36 = sadd.s32 1, %s27
      %s37 = scalar_select %p34, %s36, %s27
      %p38 = scmp.ge.s32.totalorder %s37, 1
      %s39 = scalar_select %p38, 0, %s37
      %s41 = sadd.s32 %s40, 1
      %p44 = scmp.eq.s32.totalorder %s20, 1
      %p45 = scmp.ne.s32.totalorder %s40, %s42
      %p46 = scmp.eq.s32.totalorder %s20, 0
      %p47 = por %p45, %p46
      %p48 = scmp.ne.s32.totalorder %s40, %s42
      %p49 = scmp.eq.s32.totalorder %s25, 1
      %p50 = por %p48, %p49
      %p51 = scmp.ne.s32.totalorder %s42, %s43
      %p52 = scmp.eq.s32.totalorder %s25, 0
      %p53 = por %p51, %p52
      %p54 = scmp.ne.s32.totalorder %s42, %s43
      %p55 = scmp.eq.s32.totalorder %s26, 1
      %p56 = por %p54, %p55
      %p58 = scmp.ne.s32.totalorder %s43, %s57
      %p59 = scmp.eq.s32.totalorder %s26, 0
      %p60 = por %p58, %p59
      %s62 = sadd.s32 %s61, 1
      %p65 = scmp.eq.s32.totalorder %s20, 1
      %p66 = scmp.ne.s32.totalorder %s61, %s63
      %p67 = scmp.eq.s32.totalorder %s20, 0
      %p68 = por %p66, %p67
      %p69 = scmp.ne.s32.totalorder %s61, %s63
      %p70 = scmp.eq.s32.totalorder %s25, 1
      %p71 = por %p69, %p70
      %p72 = scmp.ne.s32.totalorder %s63, %s64
      %p73 = scmp.eq.s32.totalorder %s25, 0
      %p74 = por %p72, %p73
      %p75 = scmp.ne.s32.totalorder %s63, %s64
      %p76 = scmp.eq.s32.totalorder %s26, 1
      %p77 = por %p75, %p76
      %p79 = scmp.ne.s32.totalorder %s64, %s78
      %p80 = scmp.eq.s32.totalorder %s26, 0
      %p81 = por %p79, %p80
      %s82 = ssub.s32 %s27, %s39
      %p83 = scmp.eq.s32.totalorder %s82, 0
      %s85 = sadd.s32 %s84, 1
      %s86 = scalar_select %p83, %s84, %s85
      %p89 = pneg %p83
      %p90 = scmp.eq.s32.totalorder %s20, 1
      %p91 = por %p89, %p90
      %p92 = scmp.ne.s32.totalorder %s84, %s87
      %p93 = scmp.eq.s32.totalorder %s20, 0
      %p94 = por %p92, %p93
      %p95 = scmp.ne.s32.totalorder %s84, %s87
      %p96 = scmp.eq.s32.totalorder %s25, 1
      %p97 = por %p95, %p96
      %p98 = scmp.ne.s32.totalorder %s87, %s88
      %p99 = scmp.eq.s32.totalorder %s25, 0
      %p100 = por %p98, %p99
      %p101 = scmp.ne.s32.totalorder %s87, %s88
      %p102 = scmp.eq.s32.totalorder %s26, 1
      %p103 = por %p101, %p102
      %p105 = scmp.ne.s32.totalorder %s88, %s104
      %p106 = scmp.eq.s32.totalorder %s26, 0
      %p107 = por %p105, %p106
      %s108 = ssub.s32 %s27, %s39
      %p109 = scmp.eq.s32.totalorder %s108, 0
      %s111 = sadd.s32 %s110, 1
      %s112 = scalar_select %p109, %s110, %s111
      %p115 = pneg %p109
      %p116 = scmp.eq.s32.totalorder %s20, 1
      %p117 = por %p115, %p116
      %p118 = scmp.ne.s32.totalorder %s110, %s113
      %p119 = scmp.eq.s32.totalorder %s20, 0
      %p120 = por %p118, %p119
      %p121 = scmp.ne.s32.totalorder %s110, %s113
      %p122 = scmp.eq.s32.totalorder %s25, 1
      %p123 = por %p121, %p122
      %p124 = scmp.ne.s32.totalorder %s113, %s114
      %p125 = scmp.eq.s32.totalorder %s25, 0
      %p126 = por %p124, %p125
      %p127 = scmp.ne.s32.totalorder %s113, %s114
      %p128 = scmp.eq.s32.totalorder %s26, 1
      %p129 = por %p127, %p128
      %p131 = scmp.ne.s32.totalorder %s114, %s130
      %p132 = scmp.eq.s32.totalorder %s26, 0
      %p133 = por %p131, %p132
      %s134 = ssub.s32 %s28, %s35
      %s135 = ssub.s32 %s27, %s39
      %s136 = sor.u32 %s134, %s135
      %p137 = scmp.eq.s32.totalorder %s136, 0
      %s139 = sadd.s32 %s138, 1
      %s140 = scalar_select %p137, %s138, %s139
      %p143 = pneg %p137
      %p144 = scmp.eq.s32.totalorder %s20, 1
      %p145 = por %p143, %p144
      %p146 = scmp.ne.s32.totalorder %s138, %s141
      %p147 = scmp.eq.s32.totalorder %s20, 0
      %p148 = por %p146, %p147
      %p149 = scmp.ne.s32.totalorder %s138, %s141
      %p150 = scmp.eq.s32.totalorder %s25, 1
      %p151 = por %p149, %p150
      %p152 = scmp.ne.s32.totalorder %s141, %s142
      %p153 = scmp.eq.s32.totalorder %s25, 0
      %p154 = por %p152, %p153
      %p155 = scmp.ne.s32.totalorder %s141, %s142
      %p156 = scmp.eq.s32.totalorder %s26, 1
      %p157 = por %p155, %p156
      %p159 = scmp.ne.s32.totalorder %s142, %s158
      %p160 = scmp.eq.s32.totalorder %s26, 0
      %p161 = por %p159, %p160
      %s162 = ssub.s32 %s28, %s35
      %s163 = ssub.s32 %s27, %s39
      %s164 = sor.u32 %s162, %s163
      %p165 = scmp.eq.s32.totalorder %s164, 0
      %s167 = sadd.s32 %s166, 1
      %s168 = scalar_select %p165, %s166, %s167
      %p171 = pneg %p165
      %p172 = scmp.eq.s32.totalorder %s20, 1
      %p173 = por %p171, %p172
      %p174 = scmp.ne.s32.totalorder %s166, %s169
      %p175 = scmp.eq.s32.totalorder %s20, 0
      %p176 = por %p174, %p175
      %p177 = scmp.ne.s32.totalorder %s166, %s169
      %p178 = scmp.eq.s32.totalorder %s25, 1
      %p179 = por %p177, %p178
      %p180 = scmp.ne.s32.totalorder %s169, %s170
      %p181 = scmp.eq.s32.totalorder %s25, 0
      %p182 = por %p180, %p181
      %p183 = scmp.ne.s32.totalorder %s169, %s170
      %p184 = scmp.eq.s32.totalorder %s26, 1
      %p185 = por %p183, %p184
      %p187 = scmp.ne.s32.totalorder %s170, %s186
      %p188 = scmp.eq.s32.totalorder %s26, 0
      %p189 = por %p187, %p188
      %p190 = scmp.le.s32.totalorder 1, %s20
      %p191 = scmp.lt.s32.totalorder %s20, 3
      %p192 = pnand %p190, %p191
      %p193 = pneg %p192
      // Predicated region
      $region9: #{tpu_custom_call.1} parent=5 // pred_check
        _
      $region10: #{tpu_custom_call.1} parent=5 // pred_check_branch
        %195 = sbr.rel (%p192) target = $region12
      $region11: #{tpu_custom_call.1} parent=5 // pred_region
        %s196 = ssub.s32 %s20, 1
        // Predicated region
        $region13: #{tpu_custom_call.1} parent=11 // pred_check
          %p197 = pneg %p53
        $region14: #{tpu_custom_call.1} parent=11 // pred_check_branch
          %199 = sbr.rel (%p197) target = $region16
        $region15: #{tpu_custom_call.1} parent=11 // pred_region
          %201 = vsyncadd [#allocation5], 0
          %s203 = sshll.u32 %s0, 4
          %s204 = int_to_ptr.hbm [resolvable:$true] %s203
          %206 = dma.hbm_to_smem %s204, 16, [#allocation2], [#allocation5]
        $region16: #{tpu_custom_call.1} parent=11 // pred_fallthru
          _
        // Predicated region
        $region17: #{tpu_custom_call.1} parent=11 // pred_check
          %p207 = pneg %p74
        $region18: #{tpu_custom_call.1} parent=11 // pred_check_branch
          %209 = sbr.rel (%p207) target = $region20
        $region19: #{tpu_custom_call.1} parent=11 // pred_region
          %211 = vsyncadd [#allocation7], 0
          %s213 = sshll.u32 %s1, 4
          %s214 = int_to_ptr.hbm [resolvable:$true] %s213
          %216 = dma.hbm_to_smem %s214, 16, [#allocation6], [#allocation7]
        $region20: #{tpu_custom_call.1} parent=11 // pred_fallthru
          _
        // Predicated region
        $region21: #{tpu_custom_call.1} parent=11 // pred_check
          %p217 = pneg %p100
        $region22: #{tpu_custom_call.1} parent=11 // pred_check_branch
          %219 = sbr.rel (%p217) target = $region24
        $region23: #{tpu_custom_call.1} parent=11 // pred_region
          %s220 = smul.u32 2, %s29
          %222 = vsyncadd [#allocation3], 0
          %s223 = scalar_lea.hbm %s2, %s220
          %s225 = sshll.u32 %s223, 4
          %s226 = int_to_ptr.hbm [resolvable:$true] %s225
          %s227 = sshll.u32 [#allocation8], 4
          %s228 = int_to_ptr.vmem [resolvable:$true] %s227
          %230 = dma.hbm_to_vmem [thread:$0]  %s226, 32, %s228, [#allocation3]
        $region24: #{tpu_custom_call.1} parent=11 // pred_fallthru
          _
        // Predicated region
        $region25: #{tpu_custom_call.1} parent=11 // pred_check
          %p231 = pneg %p126
        $region26: #{tpu_custom_call.1} parent=11 // pred_check_branch
          %233 = sbr.rel (%p231) target = $region28
        $region27: #{tpu_custom_call.1} parent=11 // pred_region
          %s234 = smul.u32 2, %s29
          %p235 = scmp.lt.s32.totalorder %s234, 1
          %s236 = scalar_select %p235, %s234, 1
          %s237 = scalar_lea.vmem %s3, %s236
          %s238 = smul.u32 2, %s29
        $region28: #{tpu_custom_call.1} parent=11 // pred_fallthru
          _
      $region12: #{tpu_custom_call.1} parent=5 // pred_fallthru
        _
      %p239 = scmp.lt.s32.totalorder %s20, 2
      // Predicated region
      $region29: #{tpu_custom_call.1} parent=5 // pred_check
        %p240 = pneg %p239
      $region30: #{tpu_custom_call.1} parent=5 // pred_check_branch
        %242 = sbr.rel (%p240) target = $region32
      $region31: #{tpu_custom_call.1} parent=5 // pred_region
        // Predicated region
        $region33: #{tpu_custom_call.1} parent=31 // pred_check
          %p243 = pneg %p148
        $region34: #{tpu_custom_call.1} parent=31 // pred_check_branch
          %245 = sbr.rel (%p243) target = $region36
        $region35: #{tpu_custom_call.1} parent=31 // pred_region
          %s246 = sand.u32 %s138, 1
          %s247 = scalar_lea.sflag [#allocation10], %s246
          %s248 = sand.u32 %s138, 1
          %s249 = smul.addr %s248, 8
          %s250 = scalar_lea.vmem [#allocation9], %s249
          %s251 = smul.u32 2, %s27
          %253 = vsyncadd %s247, 0
          %s254 = smul.addr %s28, 2
          %s255 = sadd.s32 %s251, %s254
          %s256 = smul.addr %s255, 4
          %s257 = scalar_lea.hbm %s4, %s256
          %s259 = sshll.u32 %s257, 4
          %s260 = int_to_ptr.hbm [resolvable:$true] %s259
          %s261 = sshll.u32 %s250, 4
          %s262 = int_to_ptr.vmem [resolvable:$true] %s261
          %264 = dma.hbm_to_vmem [thread:$0]  %s260, 128, %s262, %s247
        $region36: #{tpu_custom_call.1} parent=31 // pred_fallthru
          _
      $region32: #{tpu_custom_call.1} parent=5 // pred_fallthru
        _
      %p265 = scmp.le.s32.totalorder 1, %s20
      %p266 = scmp.lt.s32.totalorder %s20, 3
      %p267 = pnand %p265, %p266
      %p268 = pneg %p267
      // Predicated region
      $region37: #{tpu_custom_call.1} parent=5 // pred_check
        _
      $region38: #{tpu_custom_call.1} parent=5 // pred_check_branch
        %270 = sbr.rel (%p267) target = $region40
      $region39: #{tpu_custom_call.1} parent=5 // pred_region
        %s271 = ssub.s32 %s20, 1
        // Predicated region
        $region41: #{tpu_custom_call.1} parent=39 // pred_check
          %p272 = pneg %p53
        $region42: #{tpu_custom_call.1} parent=39 // pred_check_branch
          %274 = sbr.rel (%p272) target = $region44
        $region43: #{tpu_custom_call.1} parent=39 // pred_region
          %276 = dma.done [#allocation5], 16
        $region44: #{tpu_custom_call.1} parent=39 // pred_fallthru
          _
        // Predicated region
        $region45: #{tpu_custom_call.1} parent=39 // pred_check
          %p277 = pneg %p74
        $region46: #{tpu_custom_call.1} parent=39 // pred_check_branch
          %279 = sbr.rel (%p277) target = $region48
        $region47: #{tpu_custom_call.1} parent=39 // pred_region
          %281 = dma.done [#allocation7], 16
        $region48: #{tpu_custom_call.1} parent=39 // pred_fallthru
          _
        // Predicated region
        $region49: #{tpu_custom_call.1} parent=39 // pred_check
          %p282 = pneg %p100
        $region50: #{tpu_custom_call.1} parent=39 // pred_check_branch
          %284 = sbr.rel (%p282) target = $region52
        $region51: #{tpu_custom_call.1} parent=39 // pred_region
          %286 = dma.done [#allocation3], 32
        $region52: #{tpu_custom_call.1} parent=39 // pred_fallthru
          _
        %s287 = sand.u32 %s141, 1
        %s288 = scalar_lea.sflag [#allocation10], %s287
        %s289 = sand.u32 %s141, 1
        %s290 = smul.addr %s289, 8
        %s291 = scalar_lea.vmem [#allocation9], %s290
        // Predicated region
        $region53: #{tpu_custom_call.1} parent=39 // pred_check
          %p292 = pneg %p154
        $region54: #{tpu_custom_call.1} parent=39 // pred_check_branch
          %294 = sbr.rel (%p292) target = $region56
        $region55: #{tpu_custom_call.1} parent=39 // pred_region
          %296 = dma.done %s288, 128
        $region56: #{tpu_custom_call.1} parent=39 // pred_fallthru
          _
        %297 = sfence
        %p298 = pneg %p53
        %p299 = pneg %p50
        %p300 = pneg %p74
        %p301 = pneg %p71
        %p302 = pneg %p100
        %p303 = pneg %p97
        %s304 = smul.u32 2, %s29
        %p305 = scmp.lt.s32.totalorder %s304, 1
        %s306 = scalar_select %p305, %s304, 1
        %s307 = scalar_lea.vmem %s3, %s306
        %p308 = pneg %p126
        %p309 = pneg %p123
        %s310 = sand.u32 %s141, 1
        %s311 = scalar_lea.sflag [#allocation10], %s310
        %s312 = sand.u32 %s141, 1
        %s313 = smul.addr %s312, 8
        %s314 = scalar_lea.vmem [#allocation9], %s313
        %p315 = pneg %p154
        %p316 = pneg %p151
        %p317 = pneg %p182
        %p318 = pneg %p179
        %s319 = sand.u32 %s169, 1
        %s320 = scalar_lea.sflag [#allocation4], %s319
        %s321 = sand.u32 %s169, 1
        %s322 = smul.addr %s321, 16
        %s323 = scalar_lea.vmem [#allocation11], %s322
        %s324 = smul.u32 2, %s29
        %s325 = smul.u32 2, %s29
        %p326 = scmp.lt.s32.totalorder %s325, 1
        %s327 = scalar_select %p326, %s325, 1
        %s328 = scalar_lea.vmem %s3, %s327
        %s329 = smul.u32 2, %s29
        %s330 = smul.u32 2, %s29
        %s331 = smul.u32 2, %s29
        %v332 = vld [vmem:[%s291] sm:$0xff]
        %334 = vst [vmem:[#allocation1] ss:$2 sm:$0xff] %v332
        %v335 = vld.sshfl [vmem:[#allocation1] sm:$0xff pattern:$0x75316420]
        %v336 = vld.sshfl [vmem:[#allocation1 + $0x8] sm:$0xff pattern:$0x75316420]
        %339 = vst [vmem:[%s323] sm:$0xf] %v335
        %340 = vst [vmem:[%s323 + $0x8] sm:$0xf] %v336
        %v341 = vld [vmem:[#allocation8] sm:$0x3]
        %v342 = vld [vmem:[%s328] sm:$0x3]
        %s343 = sld [smem:[#allocation2 + %s30]]
        %s344 = sld [smem:[#allocation6 + %s30]]
        %v345 = vlaneseq
        %v346 = vshrl.u32 %v345, 7
        %vm347 = vcmp.eq.s32.totalorder %v346, 1
        %v348 = vsel %vm347, 1.0, 0.5
        %vm349 = vcmp.eq.s32.totalorder %v346, 2
        %v350 = vsel %vm349, 2.0, %v348
        %vm351 = vcmp.eq.s32.totalorder %v346, 3
        %v352 = vsel %vm351, 4.0, %v350
        %v354 = vperm.slane %v341, 0
        %v355 = vperm.slane %v341, 1
        %v358 = vmul.f32 %v354, %v352
        %v359 = vmul.f32 %v355, %v352
        %v360 = vstv %s343
        %v361 = vadd.f32 %v358, %v360
        %v362 = vadd.f32 %v359, %v360
        %v364 = vperm.slane %v342, 0
        %v365 = vperm.slane %v342, 1
        %v368 = vmul.f32 %v364, %v352
        %v369 = vmul.f32 %v365, %v352
        %v370 = vstv %s344
        %v371 = vadd.f32 %v368, %v370
        %v372 = vadd.f32 %v369, %v370
        %v373 = vand.u32 2147483647, %v361
        %vm374 = vcmp.le.f32.partialorder %v373, 0.7853982
        %vm375 = vcmp.lt.s32.totalorder %v361, 0
        %v376 = vand.u32 %v361, 2139095040
        %v377 = vshrl.u32 %v376, 23
        %v378 = vsub.s32 %v377, 127
        %v379 = vand.u32 2147483647, %v361
        %v380 = vand.u32 %v379, 8388607
        %v381 = vor.u32 %v380, 8388608
        %v382 = vsub.s32 0, %v381
        %v383 = vadd.s32 %v378, 1
        %vm384 = vcmp.gt.s32.totalorder %v383, 0
        %v385 = vsel %vm384, %v383, 0
        %v386 = vshrl.u32 %v385, 5
        %v387 = vand.u32 %v385, 31
        %v388 = vsub.s32 32, %v387
        %v389 = vshrl.u32 683565275, %v388
        %v390 = vshll.u32 683565275, %v387
        %v391 = vshrl.u32 2475754826, %v388
        %v392 = vor.u32 %v390, %v391
        %v393 = vshll.u32 2475754826, %v387
        %v394 = vshrl.u32 2131351028, %v388
        %v395 = vor.u32 %v393, %v394
        %v396 = vshll.u32 2131351028, %v387
        %v397 = vshrl.u32 2102212464, %v388
        %v398 = vor.u32 %v396, %v397
        %v399 = vshll.u32 2102212464, %v387
        %v400 = vshrl.u32 920167782, %v388
        %v401 = vor.u32 %v399, %v400
        %v402 = vshll.u32 920167782, %v387
        %v403 = vshrl.u32 1326507024, %v388
        %v404 = vor.u32 %v402, %v403
        %vm405 = vcmp.lt.s32.totalorder %v386, 1
        %vm406 = vcmp.lt.s32.totalorder %v386, 2
        %vm407 = vcmp.lt.s32.totalorder %v386, 3
        %vm408 = vcmp.lt.s32.totalorder %v386, 4
        %v409 = vsel %vm405, %v389, %v392
        %v410 = vsel %vm408, %v398, 2102212464
        %v411 = vsel %vm407, %v395, %v410
        %v412 = vsel %vm406, %v409, %v411
        %v413 = vsel %vm405, %v392, %v395
        %v414 = vsel %vm408, %v401, 920167782
        %v415 = vsel %vm407, %v398, %v414
        %v416 = vsel %vm406, %v413, %v415
        %v417 = vsel %vm405, %v395, %v398
        %v418 = vsel %vm408, %v404, 1326507024
        %v419 = vsel %vm407, %v401, %v418
        %v420 = vsel %vm406, %v417, %v419
        %v421 = vshll.u32 %v381, 8
        %v422 = vand.u32 %v421, 65535
        %v423 = vshrl.u32 %v421, 16
        %v424 = vand.u32 %v420, 65535
        %v425 = vshrl.u32 %v420, 16
        %v426 = vmul.u32 %v422, %v424
        %v427 = vmul.u32 %v422, %v425
        %v428 = vmul.u32 %v423, %v424
        %v429 = vmul.u32 %v423, %v425
        %v430 = vshll.u32 %v427, 16
        %v431 = vshrl.u32 %v427, 16
        %v432 = vshll.u32 %v428, 16
        %v433 = vshrl.u32 %v428, 16
        %vm434 = vc.u32 %v426, %v430
        %v435 = vsel %vm434, 1, 0
        %v436 = vadd.s32 %v426, %v430
        %v437 = vadd.s32 %v429, %v435
        %vm438 = vc.u32 %v436, %v432
        %v439 = vsel %vm438, 1, 0
        %v440 = vadd.s32 %v436, %v432
        %v441 = vadd.s32 %v437, %v439
        %v442 = vadd.s32 %v441, %v431
        %v443 = vadd.s32 %v442, %v433
        %v444 = vand.u32 %v421, 65535
        %v445 = vshrl.u32 %v421, 16
        %v446 = vand.u32 %v416, 65535
        %v447 = vshrl.u32 %v416, 16
        %v448 = vmul.u32 %v444, %v446
        %v449 = vmul.u32 %v444, %v447
        %v450 = vmul.u32 %v445, %v446
        %v451 = vmul.u32 %v445, %v447
        %v452 = vshll.u32 %v449, 16
        %v453 = vshrl.u32 %v449, 16
        %v454 = vshll.u32 %v450, 16
        %v455 = vshrl.u32 %v450, 16
        %vm456 = vc.u32 %v448, %v452
        %v457 = vsel %vm456, 1, 0
        %v458 = vadd.s32 %v448, %v452
        %v459 = vadd.s32 %v451, %v457
        %vm460 = vc.u32 %v458, %v454
        %v461 = vsel %vm460, 1, 0
        %v462 = vadd.s32 %v458, %v454
        %v463 = vadd.s32 %v459, %v461
        %v464 = vadd.s32 %v463, %v453
        %v465 = vadd.s32 %v464, %v455
        %v466 = vmul.u32 %v421, %v412
        %v467 = vadd.s32 %v443, %v462
        %vm468 = vc.u32 %v443, %v462
        %v469 = vadd.s32 %v465, 1
        %v470 = vsel %vm468, %v469, %v465
        %v471 = vadd.s32 %v466, %v470
        %v472 = vadd.s32 %v471, 536870912
        %v473 = vshrl.u32 %v472, 30
        %v474 = vshll.u32 %v473, 30
        %v475 = vsub.s32 %v471, %v474
        %vm476 = vcmp.lt.s32.totalorder %v475, 0
        %v477 = vsub.s32 0, %v475
        %v478 = vsel %vm476, %v477, %v475
        %v479 = vclz %v478
        %v480 = vsub.s32 %v479, 2
        %vm481 = vcmp.gt.s32.totalorder 0, %v480
        %v482 = vsel %vm481, 0, %v480
        %v483 = vsub.s32 32, %v482
        %v484 = vshll.u32 %v475, %v482
        %v485 = vshrl.u32 %v467, %v483
        %v486 = vor.u32 %v484, %v485
        %v487 = vsub.s32 4294967266, %v482
        %v488 = vadd.s32 %v487, 127
        %v489 = vshll.u32 %v488, 23
        %v490 = vor.u32 4788187, %v489
        %v491 = vand.u32 2147483647, %v490
        %v493 = vcvt.s32.f32 %v486
        %v494 = vmul.f32 %v493, %v491
        %v495 = vxor.u32 %v494, 2147483648
        %v496 = vsel %vm375, %v495, %v494
        %v497 = vsub.s32 4, %v473
        %v498 = vsel %vm375, %v497, %v473
        %v499 = vsel %vm374, %v361, %v496
        %v500 = vsel %vm374, 0, %v498
        %v501 = vmul.f32 %v499, %v499
        %v502 = vmul.f32 %v501, -0.001358992
        %v503 = vadd.f32 %v502, 0.041655596
        %v504 = vmul.f32 %v501, %v503
        %v505 = vadd.f32 %v504, -0.4999988
        %v506 = vmul.f32 %v501, %v505
        %v507 = vadd.f32 1.0, %v506
        %v508 = vmul.f32 %v499, %v499
        %v509 = vmul.f32 %v508, -0.00019511016
        %v510 = vadd.f32 %v509, 0.008332121
        %v511 = vmul.f32 %v508, %v510
        %v512 = vadd.f32 %v511, -0.16666654
        %v513 = vmul.f32 %v508, %v512
        %v514 = vadd.f32 %v513, 1.0
        %v515 = vmul.f32 %v514, %v499
        %vm516 = vweird.f32 %v361
        %v517 = vadd.s32 %v500, 3
        %v518 = vand.u32 %v517, 3
        %vm519 = vcmp.lt.s32.totalorder %v518, 2
        %vm520 = vcmp.eq.s32.totalorder %v518, 0
        %v521 = vxor.u32 %v515, 2147483648
        %v522 = vsel %vm520, %v507, %v521
        %vm523 = vcmp.eq.s32.totalorder %v518, 2
        %v524 = vxor.u32 %v507, 2147483648
        %v525 = vsel %vm523, %v524, %v515
        %v526 = vsel %vm519, %v522, %v525
        %v527 = vsel %vm516, nan, %v526
        %v528 = vand.u32 2147483647, %v362
        %vm529 = vcmp.le.f32.partialorder %v528, 0.7853982
        %vm530 = vcmp.lt.s32.totalorder %v362, 0
        %v531 = vand.u32 %v362, 2139095040
        %v532 = vshrl.u32 %v531, 23
        %v533 = vsub.s32 %v532, 127
        %v534 = vand.u32 2147483647, %v362
        %v535 = vand.u32 %v534, 8388607
        %v536 = vor.u32 %v535, 8388608
        %v537 = vsub.s32 0, %v536
        %v538 = vadd.s32 %v533, 1
        %vm539 = vcmp.gt.s32.totalorder %v538, 0
        %v540 = vsel %vm539, %v538, 0
        %v541 = vshrl.u32 %v540, 5
        %v542 = vand.u32 %v540, 31
        %v543 = vsub.s32 32, %v542
        %v544 = vshrl.u32 683565275, %v543
        %v545 = vshll.u32 683565275, %v542
        %v546 = vshrl.u32 2475754826, %v543
        %v547 = vor.u32 %v545, %v546
        %v548 = vshll.u32 2475754826, %v542
        %v549 = vshrl.u32 2131351028, %v543
        %v550 = vor.u32 %v548, %v549
        %v551 = vshll.u32 2131351028, %v542
        %v552 = vshrl.u32 2102212464, %v543
        %v553 = vor.u32 %v551, %v552
        %v554 = vshll.u32 2102212464, %v542
        %v555 = vshrl.u32 920167782, %v543
        %v556 = vor.u32 %v554, %v555
        %v557 = vshll.u32 920167782, %v542
        %v558 = vshrl.u32 1326507024, %v543
        %v559 = vor.u32 %v557, %v558
        %vm560 = vcmp.lt.s32.totalorder %v541, 1
        %vm561 = vcmp.lt.s32.totalorder %v541, 2
        %vm562 = vcmp.lt.s32.totalorder %v541, 3
        %vm563 = vcmp.lt.s32.totalorder %v541, 4
        %v564 = vsel %vm560, %v544, %v547
        %v565 = vsel %vm563, %v553, 2102212464
        %v566 = vsel %vm562, %v550, %v565
        %v567 = vsel %vm561, %v564, %v566
        %v568 = vsel %vm560, %v547, %v550
        %v569 = vsel %vm563, %v556, 920167782
        %v570 = vsel %vm562, %v553, %v569
        %v571 = vsel %vm561, %v568, %v570
        %v572 = vsel %vm560, %v550, %v553
        %v573 = vsel %vm563, %v559, 1326507024
        %v574 = vsel %vm562, %v556, %v573
        %v575 = vsel %vm561, %v572, %v574
        %v576 = vshll.u32 %v536, 8
        %v577 = vand.u32 %v576, 65535
        %v578 = vshrl.u32 %v576, 16
        %v579 = vand.u32 %v575, 65535
        %v580 = vshrl.u32 %v575, 16
        %v581 = vmul.u32 %v577, %v579
        %v582 = vmul.u32 %v577, %v580
        %v583 = vmul.u32 %v578, %v579
        %v584 = vmul.u32 %v578, %v580
        %v585 = vshll.u32 %v582, 16
        %v586 = vshrl.u32 %v582, 16
        %v587 = vshll.u32 %v583, 16
        %v588 = vshrl.u32 %v583, 16
        %vm589 = vc.u32 %v581, %v585
        %v590 = vsel %vm589, 1, 0
        %v591 = vadd.s32 %v581, %v585
        %v592 = vadd.s32 %v584, %v590
        %vm593 = vc.u32 %v591, %v587
        %v594 = vsel %vm593, 1, 0
        %v595 = vadd.s32 %v591, %v587
        %v596 = vadd.s32 %v592, %v594
        %v597 = vadd.s32 %v596, %v586
        %v598 = vadd.s32 %v597, %v588
        %v599 = vand.u32 %v576, 65535
        %v600 = vshrl.u32 %v576, 16
        %v601 = vand.u32 %v571, 65535
        %v602 = vshrl.u32 %v571, 16
        %v603 = vmul.u32 %v599, %v601
        %v604 = vmul.u32 %v599, %v602
        %v605 = vmul.u32 %v600, %v601
        %v606 = vmul.u32 %v600, %v602
        %v607 = vshll.u32 %v604, 16
        %v608 = vshrl.u32 %v604, 16
        %v609 = vshll.u32 %v605, 16
        %v610 = vshrl.u32 %v605, 16
        %vm611 = vc.u32 %v603, %v607
        %v612 = vsel %vm611, 1, 0
        %v613 = vadd.s32 %v603, %v607
        %v614 = vadd.s32 %v606, %v612
        %vm615 = vc.u32 %v613, %v609
        %v616 = vsel %vm615, 1, 0
        %v617 = vadd.s32 %v613, %v609
        %v618 = vadd.s32 %v614, %v616
        %v619 = vadd.s32 %v618, %v608
        %v620 = vadd.s32 %v619, %v610
        %v621 = vmul.u32 %v576, %v567
        %v622 = vadd.s32 %v598, %v617
        %vm623 = vc.u32 %v598, %v617
        %v624 = vadd.s32 %v620, 1
        %v625 = vsel %vm623, %v624, %v620
        %v626 = vadd.s32 %v621, %v625
        %v627 = vadd.s32 %v626, 536870912
        %v628 = vshrl.u32 %v627, 30
        %v629 = vshll.u32 %v628, 30
        %v630 = vsub.s32 %v626, %v629
        %vm631 = vcmp.lt.s32.totalorder %v630, 0
        %v632 = vsub.s32 0, %v630
        %v633 = vsel %vm631, %v632, %v630
        %v634 = vclz %v633
        %v635 = vsub.s32 %v634, 2
        %vm636 = vcmp.gt.s32.totalorder 0, %v635
        %v637 = vsel %vm636, 0, %v635
        %v638 = vsub.s32 32, %v637
        %v639 = vshll.u32 %v630, %v637
        %v640 = vshrl.u32 %v622, %v638
        %v641 = vor.u32 %v639, %v640
        %v642 = vsub.s32 4294967266, %v637
        %v643 = vadd.s32 %v642, 127
        %v644 = vshll.u32 %v643, 23
        %v645 = vor.u32 4788187, %v644
        %v646 = vand.u32 2147483647, %v645
        %v648 = vcvt.s32.f32 %v641
        %v649 = vmul.f32 %v648, %v646
        %v650 = vxor.u32 %v649, 2147483648
        %v651 = vsel %vm530, %v650, %v649
        %v652 = vsub.s32 4, %v628
        %v653 = vsel %vm530, %v652, %v628
        %v654 = vsel %vm529, %v362, %v651
        %v655 = vsel %vm529, 0, %v653
        %v656 = vmul.f32 %v654, %v654
        %v657 = vmul.f32 %v656, -0.001358992
        %v658 = vadd.f32 %v657, 0.041655596
        %v659 = vmul.f32 %v656, %v658
        %v660 = vadd.f32 %v659, -0.4999988
        %v661 = vmul.f32 %v656, %v660
        %v662 = vadd.f32 1.0, %v661
        %v663 = vmul.f32 %v654, %v654
        %v664 = vmul.f32 %v663, -0.00019511016
        %v665 = vadd.f32 %v664, 0.008332121
        %v666 = vmul.f32 %v663, %v665
        %v667 = vadd.f32 %v666, -0.16666654
        %v668 = vmul.f32 %v663, %v667
        %v669 = vadd.f32 %v668, 1.0
        %v670 = vmul.f32 %v669, %v654
        %vm671 = vweird.f32 %v362
        %v672 = vadd.s32 %v655, 3
        %v673 = vand.u32 %v672, 3
        %vm674 = vcmp.lt.s32.totalorder %v673, 2
        %vm675 = vcmp.eq.s32.totalorder %v673, 0
        %v676 = vxor.u32 %v670, 2147483648
        %v677 = vsel %vm675, %v662, %v676
        %vm678 = vcmp.eq.s32.totalorder %v673, 2
        %v679 = vxor.u32 %v662, 2147483648
        %v680 = vsel %vm678, %v679, %v670
        %v681 = vsel %vm674, %v677, %v680
        %v682 = vsel %vm671, nan, %v681
        %v683 = vand.u32 2147483647, %v371
        %vm684 = vcmp.le.f32.partialorder %v683, 0.7853982
        %vm685 = vcmp.lt.s32.totalorder %v371, 0
        %v686 = vand.u32 %v371, 2139095040
        %v687 = vshrl.u32 %v686, 23
        %v688 = vsub.s32 %v687, 127
        %v689 = vand.u32 2147483647, %v371
        %v690 = vand.u32 %v689, 8388607
        %v691 = vor.u32 %v690, 8388608
        %v692 = vsub.s32 0, %v691
        %v693 = vadd.s32 %v688, 1
        %vm694 = vcmp.gt.s32.totalorder %v693, 0
        %v695 = vsel %vm694, %v693, 0
        %v696 = vshrl.u32 %v695, 5
        %v697 = vand.u32 %v695, 31
        %v698 = vsub.s32 32, %v697
        %v699 = vshrl.u32 683565275, %v698
        %v700 = vshll.u32 683565275, %v697
        %v701 = vshrl.u32 2475754826, %v698
        %v702 = vor.u32 %v700, %v701
        %v703 = vshll.u32 2475754826, %v697
        %v704 = vshrl.u32 2131351028, %v698
        %v705 = vor.u32 %v703, %v704
        %v706 = vshll.u32 2131351028, %v697
        %v707 = vshrl.u32 2102212464, %v698
        %v708 = vor.u32 %v706, %v707
        %v709 = vshll.u32 2102212464, %v697
        %v710 = vshrl.u32 920167782, %v698
        %v711 = vor.u32 %v709, %v710
        %v712 = vshll.u32 920167782, %v697
        %v713 = vshrl.u32 1326507024, %v698
        %v714 = vor.u32 %v712, %v713
        %vm715 = vcmp.lt.s32.totalorder %v696, 1
        %vm716 = vcmp.lt.s32.totalorder %v696, 2
        %vm717 = vcmp.lt.s32.totalorder %v696, 3
        %vm718 = vcmp.lt.s32.totalorder %v696, 4
        %v719 = vsel %vm715, %v699, %v702
        %v720 = vsel %vm718, %v708, 2102212464
        %v721 = vsel %vm717, %v705, %v720
        %v722 = vsel %vm716, %v719, %v721
        %v723 = vsel %vm715, %v702, %v705
        %v724 = vsel %vm718, %v711, 920167782
        %v725 = vsel %vm717, %v708, %v724
        %v726 = vsel %vm716, %v723, %v725
        %v727 = vsel %vm715, %v705, %v708
        %v728 = vsel %vm718, %v714, 1326507024
        %v729 = vsel %vm717, %v711, %v728
        %v730 = vsel %vm716, %v727, %v729
        %v731 = vshll.u32 %v691, 8
        %v732 = vand.u32 %v731, 65535
        %v733 = vshrl.u32 %v731, 16
        %v734 = vand.u32 %v730, 65535
        %v735 = vshrl.u32 %v730, 16
        %v736 = vmul.u32 %v732, %v734
        %v737 = vmul.u32 %v732, %v735
        %v738 = vmul.u32 %v733, %v734
        %v739 = vmul.u32 %v733, %v735
        %v740 = vshll.u32 %v737, 16
        %v741 = vshrl.u32 %v737, 16
        %v742 = vshll.u32 %v738, 16
        %v743 = vshrl.u32 %v738, 16
        %vm744 = vc.u32 %v736, %v740
        %v745 = vsel %vm744, 1, 0
        %v746 = vadd.s32 %v736, %v740
        %v747 = vadd.s32 %v739, %v745
        %vm748 = vc.u32 %v746, %v742
        %v749 = vsel %vm748, 1, 0
        %v750 = vadd.s32 %v746, %v742
        %v751 = vadd.s32 %v747, %v749
        %v752 = vadd.s32 %v751, %v741
        %v753 = vadd.s32 %v752, %v743
        %v754 = vand.u32 %v731, 65535
        %v755 = vshrl.u32 %v731, 16
        %v756 = vand.u32 %v726, 65535
        %v757 = vshrl.u32 %v726, 16
        %v758 = vmul.u32 %v754, %v756
        %v759 = vmul.u32 %v754, %v757
        %v760 = vmul.u32 %v755, %v756
        %v761 = vmul.u32 %v755, %v757
        %v762 = vshll.u32 %v759, 16
        %v763 = vshrl.u32 %v759, 16
        %v764 = vshll.u32 %v760, 16
        %v765 = vshrl.u32 %v760, 16
        %vm766 = vc.u32 %v758, %v762
        %v767 = vsel %vm766, 1, 0
        %v768 = vadd.s32 %v758, %v762
        %v769 = vadd.s32 %v761, %v767
        %vm770 = vc.u32 %v768, %v764
        %v771 = vsel %vm770, 1, 0
        %v772 = vadd.s32 %v768, %v764
        %v773 = vadd.s32 %v769, %v771
        %v774 = vadd.s32 %v773, %v763
        %v775 = vadd.s32 %v774, %v765
        %v776 = vmul.u32 %v731, %v722
        %v777 = vadd.s32 %v753, %v772
        %vm778 = vc.u32 %v753, %v772
        %v779 = vadd.s32 %v775, 1
        %v780 = vsel %vm778, %v779, %v775
        %v781 = vadd.s32 %v776, %v780
        %v782 = vadd.s32 %v781, 536870912
        %v783 = vshrl.u32 %v782, 30
        %v784 = vshll.u32 %v783, 30
        %v785 = vsub.s32 %v781, %v784
        %vm786 = vcmp.lt.s32.totalorder %v785, 0
        %v787 = vsub.s32 0, %v785
        %v788 = vsel %vm786, %v787, %v785
        %v789 = vclz %v788
        %v790 = vsub.s32 %v789, 2
        %vm791 = vcmp.gt.s32.totalorder 0, %v790
        %v792 = vsel %vm791, 0, %v790
        %v793 = vsub.s32 32, %v792
        %v794 = vshll.u32 %v785, %v792
        %v795 = vshrl.u32 %v777, %v793
        %v796 = vor.u32 %v794, %v795
        %v797 = vsub.s32 4294967266, %v792
        %v798 = vadd.s32 %v797, 127
        %v799 = vshll.u32 %v798, 23
        %v800 = vor.u32 4788187, %v799
        %v801 = vand.u32 2147483647, %v800
        %v803 = vcvt.s32.f32 %v796
        %v804 = vmul.f32 %v803, %v801
        %v805 = vxor.u32 %v804, 2147483648
        %v806 = vsel %vm685, %v805, %v804
        %v807 = vsub.s32 4, %v783
        %v808 = vsel %vm685, %v807, %v783
        %v809 = vsel %vm684, %v371, %v806
        %v810 = vsel %vm684, 0, %v808
        %v811 = vmul.f32 %v809, %v809
        %v812 = vmul.f32 %v811, -0.001358992
        %v813 = vadd.f32 %v812, 0.041655596
        %v814 = vmul.f32 %v811, %v813
        %v815 = vadd.f32 %v814, -0.4999988
        %v816 = vmul.f32 %v811, %v815
        %v817 = vadd.f32 1.0, %v816
        %v818 = vmul.f32 %v809, %v809
        %v819 = vmul.f32 %v818, -0.00019511016
        %v820 = vadd.f32 %v819, 0.008332121
        %v821 = vmul.f32 %v818, %v820
        %v822 = vadd.f32 %v821, -0.16666654
        %v823 = vmul.f32 %v818, %v822
        %v824 = vadd.f32 %v823, 1.0
        %v825 = vmul.f32 %v824, %v809
        %vm826 = vweird.f32 %v371
        %v827 = vadd.s32 %v810, 3
        %v828 = vand.u32 %v827, 3
        %vm829 = vcmp.lt.s32.totalorder %v828, 2
        %vm830 = vcmp.eq.s32.totalorder %v828, 0
        %v831 = vxor.u32 %v825, 2147483648
        %v832 = vsel %vm830, %v817, %v831
        %vm833 = vcmp.eq.s32.totalorder %v828, 2
        %v834 = vxor.u32 %v817, 2147483648
        %v835 = vsel %vm833, %v834, %v825
        %v836 = vsel %vm829, %v832, %v835
        %v837 = vsel %vm826, nan, %v836
        %v838 = vand.u32 2147483647, %v372
        %vm839 = vcmp.le.f32.partialorder %v838, 0.7853982
        %vm840 = vcmp.lt.s32.totalorder %v372, 0
        %v841 = vand.u32 %v372, 2139095040
        %v842 = vshrl.u32 %v841, 23
        %v843 = vsub.s32 %v842, 127
        %v844 = vand.u32 2147483647, %v372
        %v845 = vand.u32 %v844, 8388607
        %v846 = vor.u32 %v845, 8388608
        %v847 = vsub.s32 0, %v846
        %v848 = vadd.s32 %v843, 1
        %vm849 = vcmp.gt.s32.totalorder %v848, 0
        %v850 = vsel %vm849, %v848, 0
        %v851 = vshrl.u32 %v850, 5
        %v852 = vand.u32 %v850, 31
        %v853 = vsub.s32 32, %v852
        %v854 = vshrl.u32 683565275, %v853
        %v855 = vshll.u32 683565275, %v852
        %v856 = vshrl.u32 2475754826, %v853
        %v857 = vor.u32 %v855, %v856
        %v858 = vshll.u32 2475754826, %v852
        %v859 = vshrl.u32 2131351028, %v853
        %v860 = vor.u32 %v858, %v859
        %v861 = vshll.u32 2131351028, %v852
        %v862 = vshrl.u32 2102212464, %v853
        %v863 = vor.u32 %v861, %v862
        %v864 = vshll.u32 2102212464, %v852
        %v865 = vshrl.u32 920167782, %v853
        %v866 = vor.u32 %v864, %v865
        %v867 = vshll.u32 920167782, %v852
        %v868 = vshrl.u32 1326507024, %v853
        %v869 = vor.u32 %v867, %v868
        %vm870 = vcmp.lt.s32.totalorder %v851, 1
        %vm871 = vcmp.lt.s32.totalorder %v851, 2
        %vm872 = vcmp.lt.s32.totalorder %v851, 3
        %vm873 = vcmp.lt.s32.totalorder %v851, 4
        %v874 = vsel %vm870, %v854, %v857
        %v875 = vsel %vm873, %v863, 2102212464
        %v876 = vsel %vm872, %v860, %v875
        %v877 = vsel %vm871, %v874, %v876
        %v878 = vsel %vm870, %v857, %v860
        %v879 = vsel %vm873, %v866, 920167782
        %v880 = vsel %vm872, %v863, %v879
        %v881 = vsel %vm871, %v878, %v880
        %v882 = vsel %vm870, %v860, %v863
        %v883 = vsel %vm873, %v869, 1326507024
        %v884 = vsel %vm872, %v866, %v883
        %v885 = vsel %vm871, %v882, %v884
        %v886 = vshll.u32 %v846, 8
        %v887 = vand.u32 %v886, 65535
        %v888 = vshrl.u32 %v886, 16
        %v889 = vand.u32 %v885, 65535
        %v890 = vshrl.u32 %v885, 16
        %v891 = vmul.u32 %v887, %v889
        %v892 = vmul.u32 %v887, %v890
        %v893 = vmul.u32 %v888, %v889
        %v894 = vmul.u32 %v888, %v890
        %v895 = vshll.u32 %v892, 16
        %v896 = vshrl.u32 %v892, 16
        %v897 = vshll.u32 %v893, 16
        %v898 = vshrl.u32 %v893, 16
        %vm899 = vc.u32 %v891, %v895
        %v900 = vsel %vm899, 1, 0
        %v901 = vadd.s32 %v891, %v895
        %v902 = vadd.s32 %v894, %v900
        %vm903 = vc.u32 %v901, %v897
        %v904 = vsel %vm903, 1, 0
        %v905 = vadd.s32 %v901, %v897
        %v906 = vadd.s32 %v902, %v904
        %v907 = vadd.s32 %v906, %v896
        %v908 = vadd.s32 %v907, %v898
        %v909 = vand.u32 %v886, 65535
        %v910 = vshrl.u32 %v886, 16
        %v911 = vand.u32 %v881, 65535
        %v912 = vshrl.u32 %v881, 16
        %v913 = vmul.u32 %v909, %v911
        %v914 = vmul.u32 %v909, %v912
        %v915 = vmul.u32 %v910, %v911
        %v916 = vmul.u32 %v910, %v912
        %v917 = vshll.u32 %v914, 16
        %v918 = vshrl.u32 %v914, 16
        %v919 = vshll.u32 %v915, 16
        %v920 = vshrl.u32 %v915, 16
        %vm921 = vc.u32 %v913, %v917
        %v922 = vsel %vm921, 1, 0
        %v923 = vadd.s32 %v913, %v917
        %v924 = vadd.s32 %v916, %v922
        %vm925 = vc.u32 %v923, %v919
        %v926 = vsel %vm925, 1, 0
        %v927 = vadd.s32 %v923, %v919
        %v928 = vadd.s32 %v924, %v926
        %v929 = vadd.s32 %v928, %v918
        %v930 = vadd.s32 %v929, %v920
        %v931 = vmul.u32 %v886, %v877
        %v932 = vadd.s32 %v908, %v927
        %vm933 = vc.u32 %v908, %v927
        %v934 = vadd.s32 %v930, 1
        %v935 = vsel %vm933, %v934, %v930
        %v936 = vadd.s32 %v931, %v935
        %v937 = vadd.s32 %v936, 536870912
        %v938 = vshrl.u32 %v937, 30
        %v939 = vshll.u32 %v938, 30
        %v940 = vsub.s32 %v936, %v939
        %vm941 = vcmp.lt.s32.totalorder %v940, 0
        %v942 = vsub.s32 0, %v940
        %v943 = vsel %vm941, %v942, %v940
        %v944 = vclz %v943
        %v945 = vsub.s32 %v944, 2
        %vm946 = vcmp.gt.s32.totalorder 0, %v945
        %v947 = vsel %vm946, 0, %v945
        %v948 = vsub.s32 32, %v947
        %v949 = vshll.u32 %v940, %v947
        %v950 = vshrl.u32 %v932, %v948
        %v951 = vor.u32 %v949, %v950
        %v952 = vsub.s32 4294967266, %v947
        %v953 = vadd.s32 %v952, 127
        %v954 = vshll.u32 %v953, 23
        %v955 = vor.u32 4788187, %v954
        %v956 = vand.u32 2147483647, %v955
        %v958 = vcvt.s32.f32 %v951
        %v959 = vmul.f32 %v958, %v956
        %v960 = vxor.u32 %v959, 2147483648
        %v961 = vsel %vm840, %v960, %v959
        %v962 = vsub.s32 4, %v938
        %v963 = vsel %vm840, %v962, %v938
        %v964 = vsel %vm839, %v372, %v961
        %v965 = vsel %vm839, 0, %v963
        %v966 = vmul.f32 %v964, %v964
        %v967 = vmul.f32 %v966, -0.001358992
        %v968 = vadd.f32 %v967, 0.041655596
        %v969 = vmul.f32 %v966, %v968
        %v970 = vadd.f32 %v969, -0.4999988
        %v971 = vmul.f32 %v966, %v970
        %v972 = vadd.f32 1.0, %v971
        %v973 = vmul.f32 %v964, %v964
        %v974 = vmul.f32 %v973, -0.00019511016
        %v975 = vadd.f32 %v974, 0.008332121
        %v976 = vmul.f32 %v973, %v975
        %v977 = vadd.f32 %v976, -0.16666654
        %v978 = vmul.f32 %v973, %v977
        %v979 = vadd.f32 %v978, 1.0
        %v980 = vmul.f32 %v979, %v964
        %vm981 = vweird.f32 %v372
        %v982 = vadd.s32 %v965, 3
        %v983 = vand.u32 %v982, 3
        %vm984 = vcmp.lt.s32.totalorder %v983, 2
        %vm985 = vcmp.eq.s32.totalorder %v983, 0
        %v986 = vxor.u32 %v980, 2147483648
        %v987 = vsel %vm985, %v972, %v986
        %vm988 = vcmp.eq.s32.totalorder %v983, 2
        %v989 = vxor.u32 %v972, 2147483648
        %v990 = vsel %vm988, %v989, %v980
        %v991 = vsel %vm984, %v987, %v990
        %v992 = vsel %vm981, nan, %v991
        %v993 = vadd.f32 %v527, %v837
        %v994 = vadd.f32 %v682, %v992
        %v995 = vmul.f32 %v993, 0.5
        %v996 = vmul.f32 %v994, 0.5
        %v999 = vrot.slane %v995, 4
        %v1000 = vrot.slane %v996, 4
        %1003 = vst [vmem:[%s323] sm:$0xf0] %v999
        %1004 = vst [vmem:[%s323 + $0x8] sm:$0xf0] %v1000
        %s1005 = sand.u32 %s169, 1
        %s1006 = scalar_lea.sflag [#allocation4], %s1005
        %s1007 = sand.u32 %s169, 1
        %s1008 = smul.addr %s1007, 16
        %s1009 = scalar_lea.vmem [#allocation11], %s1008
        // Predicated region
        $region57: #{tpu_custom_call.1} parent=39 // pred_check
          %p1010 = pneg %p179
        $region58: #{tpu_custom_call.1} parent=39 // pred_check_branch
          %1012 = sbr.rel (%p1010) target = $region60
        $region59: #{tpu_custom_call.1} parent=39 // pred_region
          %s1013 = smul.u32 2, %s29
          %1015 = vsyncadd %s1006, 0
          %s1016 = smul.addr %s30, 2
          %s1017 = sadd.s32 %s1013, %s1016
          %s1018 = smul.addr %s1017, 8
          %s1019 = scalar_lea.hbm %s5, %s1018
          %s1021 = sshll.u32 %s1009, 4
          %s1022 = int_to_ptr.vmem [resolvable:$true] %s1021
          %s1023 = sshll.u32 %s1019, 4
          %s1024 = int_to_ptr.hbm [resolvable:$true] %s1023
          %1026 = dma.vmem_to_hbm [thread:$0]  %s1022, 256, %s1024, %s1006
        $region60: #{tpu_custom_call.1} parent=39 // pred_fallthru
          _
      $region40: #{tpu_custom_call.1} parent=5 // pred_fallthru
        _
      %p1027 = scmp.le.s32.totalorder 2, %s20
      // Predicated region
      $region61: #{tpu_custom_call.1} parent=5 // pred_check
        %p1028 = pneg %p1027
      $region62: #{tpu_custom_call.1} parent=5 // pred_check_branch
        %1030 = sbr.rel (%p1028) target = $region64
      $region63: #{tpu_custom_call.1} parent=5 // pred_region
        %s1031 = ssub.s32 %s20, 2
        // Predicated region
        $region65: #{tpu_custom_call.1} parent=63 // pred_check
          %p1032 = pneg %p185
        $region66: #{tpu_custom_call.1} parent=63 // pred_check_branch
          %1034 = sbr.rel (%p1032) target = $region68
        $region67: #{tpu_custom_call.1} parent=63 // pred_region
          %s1035 = sand.u32 %s170, 1
          %s1036 = scalar_lea.sflag [#allocation4], %s1035
          %s1037 = sand.u32 %s170, 1
          %s1038 = smul.addr %s1037, 16
          %s1039 = scalar_lea.vmem [#allocation11], %s1038
          %1041 = dma.done %s1036, 256
        $region68: #{tpu_custom_call.1} parent=63 // pred_fallthru
          _
      $region64: #{tpu_custom_call.1} parent=5 // pred_fallthru
        _
    $region6: #{tpu_custom_call.1} parent=1 // loop_footer
      %s24 = sadd.s32 1, %s20
    $region7: #{tpu_custom_call.1} parent=1 // loop_footer_branch
      %19 = sbr.rel target = $region3
    $region8: #{tpu_custom_call.1} parent=1 // loop_exit
      _
    %1042 = vsyncpa [#allocation3], 1
    %s1043 = scalar_lea.sflag [#allocation3], 1
    %1044 = vsyncpa %s1043, 1
    %1045 = vsyncpa [#allocation10], 1
    %s1046 = scalar_lea.sflag [#allocation10], 1
    %1047 = vsyncpa %s1046, 1
    %1048 = vsyncpa [#allocation4], 1
    %s1049 = scalar_lea.sflag [#allocation4], 1
    %1050 = vsyncpa %s1049, 1
    %1051 = vsyncpa [#allocation5], 1
    %s1052 = scalar_lea.sflag [#allocation5], 1
    %1053 = vsyncpa %s1052, 1
    %1054 = vsyncpa [#allocation7], 1

</llo_original>
